<compile_context>
chip_gen: v7x
topology: tpu7x:2x2x1
jax: 0.10.0
libtpu: 0.0.40
codegen_flags: <defaults>
</compile_context>

<pallas_src>
import numpy as np
import jax
import jax.numpy as jnp
from jax import lax
from jax.experimental import pallas as pl
from jax.experimental.pallas import tpu as pltpu


LANE = 128          # TPU lane width
SUBLANE = 8         # TPU sublane width (f32)
MAX_TILE_B = 2048   # rows per grid step

_PREC = lax.Precision.DEFAULT


def _round_up(x, m):
    return ((x + m - 1) // m) * m


# ----------------------------- Pallas kernels -------------------------------

def _mlp_kernel_vanilla(x_ref, w1_ref, b1_ref, w2_ref, b2_ref, o_ref, h_ref):
    # x: (tb, Din)  w1: (Din, Hp)  b1: (1, Hp)  w2: (Hp, Od)  b2: (1, Od)
    x = x_ref[...]
    if x.shape[-1] == 1:
        # K=1 contraction: broadcast multiply on the VPU, skip the MXU push.
        h = x * w1_ref[...]                                   # (tb,1)*(1,Hp)
    else:
        h = jnp.dot(x, w1_ref[...],
                    preferred_element_type=jnp.float32, precision=_PREC)
    h_ref[...] = jnp.maximum(h + b1_ref[...], 0.0)            # fc1 + ReLU
    y = jnp.dot(h_ref[...], w2_ref[...],
                preferred_element_type=jnp.float32, precision=_PREC)
    o_ref[...] = (y + b2_ref[...]).astype(o_ref.dtype)        # fc2 + bias


def _mlp_kernel_prospective(xt_ref, freqs_ref, phase_ref,
                            w1x_ref, w1t_ref, b1_ref,
                            w2_ref, b2_ref, o_ref, h_ref):
    # xt: (tb, in_dim+1) = [x | t]   freqs/phase: (1, tdim)
    # w1x: (in_dim, Hp)  w1t: (tdim, Hp)  b1: (1, Hp)  w2: (Hp, Od)  b2: (1, Od)
    in_dim = w1x_ref.shape[0]
    x = xt_ref[:, :in_dim]                                    # (tb, in_dim)
    tt = xt_ref[:, in_dim:in_dim + 1]                         # (tb, 1)

    # Fused TimeEmbedding: [sin(f*t), cos(f*t)] == sin(t*[f,f] + [0, pi/2]).
    # One EUP pass + one MXU push instead of sin+cos and two K-split dots.
    # NOTE: zero-padded batch rows use t=0 here; their garbage output rows
    # are sliced off in the wrapper (do NOT reduce over the padded batch).
    emb = jnp.sin(tt * freqs_ref[...] + phase_ref[...])       # (tb, tdim)

    if in_dim == 1:
        h = x * w1x_ref[...]                                  # K=1 on the VPU
    else:
        h = jnp.dot(x, w1x_ref[...],
                    preferred_element_type=jnp.float32, precision=_PREC)
    h = h + jnp.dot(emb, w1t_ref[...],
                    preferred_element_type=jnp.float32, precision=_PREC)
    h_ref[...] = jnp.maximum(h + b1_ref[...], 0.0)            # + bias, ReLU
    y = jnp.dot(h_ref[...], w2_ref[...],
                preferred_element_type=jnp.float32, precision=_PREC)
    o_ref[...] = (y + b2_ref[...]).astype(o_ref.dtype)


# ----------------------------- Model wrapper --------------------------------

def init_mlp_params(key, in_dim=1, out_dim=2, hidden_dim=32, tdim=50,
                    prospective=False):
    """Deterministic synthetic parameters mirroring nn.Linear init.

    Stores both the raw (reference) weights and kernel-ready padded copies
    (padding done ONCE here, never per forward call).
    """
    fc1_in = in_dim + tdim if prospective else in_dim
    k1, k2, k3, k4 = jax.random.split(key, 4)
    lim1 = 1.0 / np.sqrt(fc1_in)
    lim2 = 1.0 / np.sqrt(hidden_dim)
    w1 = jax.random.uniform(k1, (fc1_in, hidden_dim), jnp.float32, -lim1, lim1)
    b1 = jax.random.uniform(k2, (1, hidden_dim), jnp.float32, -lim1, lim1)
    w2 = jax.random.uniform(k3, (hidden_dim, out_dim), jnp.float32, -lim2, lim2)
    b2 = jax.random.uniform(k4, (1, out_dim), jnp.float32, -lim2, lim2)

    params = {"w1": w1, "b1": b1, "w2": w2, "b2": b2,
              "in_dim": in_dim, "out_dim": out_dim,
              "hidden_dim": hidden_dim, "tdim": tdim}

    # Hidden dim is lane-padded (weights stay VMEM-resident across the grid);
    # output keeps its TRUE width (no HBM write amplification).
    Hp = _round_up(hidden_dim, LANE)
    b1_p = jnp.zeros((1, Hp), jnp.float32).at[:, :hidden_dim].set(b1)
    w2_p = jnp.zeros((Hp, out_dim), jnp.float32).at[:hidden_dim, :].set(w2)

    if prospective:
        half = tdim // 2
        freqs = 2.0 * np.pi / np.arange(2, tdim + 1, 2, dtype=np.float32)
        params["freqs"] = jnp.asarray(freqs[None, :])          # (1, half) ref
        # sin/cos fused as sin(t*freqs_full + phase)
        freqs_full = jnp.asarray(
            np.concatenate([freqs, freqs])[None, :])           # (1, tdim)
        phase = jnp.asarray(
            np.concatenate([np.zeros(half, np.float32),
                            np.full(half, np.pi / 2, np.float32)])[None, :])
        w1x = jnp.zeros((in_dim, Hp), jnp.float32).at[:, :hidden_dim].set(
            w1[:in_dim])
        w1t = jnp.zeros((tdim, Hp), jnp.float32).at[:, :hidden_dim].set(
            w1[in_dim:])
        params["kernel"] = dict(w1x=w1x, w1t=w1t, b1=b1_p, w2=w2_p, b2=b2,
                                freqs_full=freqs_full, phase=phase)
    else:
        w1_p = jnp.zeros((in_dim, Hp), jnp.float32).at[:, :hidden_dim].set(w1)
        params["kernel"] = dict(w1=w1_p, b1=b1_p, w2=w2_p, b2=b2)
    return params


def mlp_forward(params, x, t, prospective=False):
    """Matches MLP.forward(x, t) semantics; fully fused in one pallas_call."""
    kp = params["kernel"]
    B, in_dim = x.shape
    out_dim = params["out_dim"]
    Hp = kp["w2"].shape[0]

    # Row-tile the batch. Aim for >=2 grid steps (v7x megacore) whenever the
    # batch is big enough, capped at MAX_TILE_B; pad so the grid divides evenly.
    tb = min(MAX_TILE_B, _round_up(max((B + 1) // 2, 1), SUBLANE))
    B_pad = _round_up(B, tb)
    nb = B_pad // tb

    row = lambda i: (i, 0)      # batch-tiled arrays
    const = lambda i: (0, 0)    # weights/biases: resident across grid steps

    cparams = pltpu.CompilerParams(
        dimension_semantics=("parallel",),          # megacore split on v7x
        vmem_limit_bytes=32 * 1024 * 1024,          # ample; safe on v5e/v6e/v7x
    )
    scratch = [pltpu.VMEM((tb, Hp), jnp.float32)]   # ReLU intermediate
    out_shape = jax.ShapeDtypeStruct((B_pad, out_dim), x.dtype)

    if prospective:
        tdim = kp["freqs_full"].shape[1]
        # Single batch-tiled input stream: [x | t].
        xt = jnp.concatenate([x, t.astype(x.dtype)[:, None]], axis=-1)
        if B_pad != B:
            # Padded rows run through the kernel with t=0/x=0; their output
            # rows are garbage and are sliced off below.
            xt = jnp.pad(xt, ((0, B_pad - B), (0, 0)))
        y = pl.pallas_call(
            _mlp_kernel_prospective,
            out_shape=out_shape,
            grid=(nb,),
            in_specs=[
                pl.BlockSpec((tb, in_dim + 1), row),   # [x | t]
                pl.BlockSpec((1, tdim), const),        # freqs_full
                pl.BlockSpec((1, tdim), const),        # phase
                pl.BlockSpec((in_dim, Hp), const),     # w1 (x rows)
                pl.BlockSpec((tdim, Hp), const),       # w1 (time-emb rows)
                pl.BlockSpec((1, Hp), const),          # b1
                pl.BlockSpec((Hp, out_dim), const),    # w2
                pl.BlockSpec((1, out_dim), const),     # b2
            ],
            out_specs=pl.BlockSpec((tb, out_dim), row),
            scratch_shapes=scratch,
            compiler_params=cparams,
        )(xt, kp["freqs_full"], kp["phase"], kp["w1x"], kp["w1t"],
          kp["b1"], kp["w2"], kp["b2"])
    else:
        xb = x if B_pad == B else jnp.pad(x, ((0, B_pad - B), (0, 0)))
        y = pl.pallas_call(
            _mlp_kernel_vanilla,
            out_shape=out_shape,
            grid=(nb,),
            in_specs=[
                pl.BlockSpec((tb, in_dim), row),       # x
                pl.BlockSpec((in_dim, Hp), const),     # w1
                pl.BlockSpec((1, Hp), const),          # b1
                pl.BlockSpec((Hp, out_dim), const),    # w2
                pl.BlockSpec((1, out_dim), const),     # b2
            ],
            out_specs=pl.BlockSpec((tb, out_dim), row),
            scratch_shapes=scratch,
            compiler_params=cparams,
        )(xb, kp["w1"], kp["b1"], kp["w2"], kp["b2"])

    # Strip the batch padding (output width is already exact: no column slice).
    return y[:B] if B_pad != B else y


def mlp_reference(params, x, t, prospective=False):
    """Pure-JAX reference (unpadded, un-split weights) for correctness."""
    if prospective:
        tt = t[..., None]
        t_emb = jnp.concatenate(
            [jnp.sin(params["freqs"] * tt), jnp.cos(params["freqs"] * tt)],
            axis=-1)
        x = jnp.concatenate([x, t_emb], axis=-1)
    h = jnp.maximum(x @ params["w1"] + params["b1"], 0.0)
    return h @ params["w2"] + params["b2"]


# --------------------------------- Main --------------------------------------

if __name__ == "__main__":
    key = jax.random.PRNGKey(0)
    kx, kt, kp1, kp2, kxb, ktb = jax.random.split(key, 6)

    batch, in_dim, out_dim, hidden_dim, tdim = 8, 1, 2, 32, 50
    x = jax.random.normal(kx, (batch, in_dim), jnp.float32)
    t = jax.random.uniform(kt, (batch,), jnp.float32, 0.0, 1.0)

    # vanilla MLP (prospective=False)
    params_v = init_mlp_params(kp1, in_dim, out_dim, hidden_dim, tdim,
                               prospective=False)
    out_v = jax.block_until_ready(mlp_forward(params_v, x, t, prospective=False))
    ref_v = mlp_reference(params_v, x, t, prospective=False)
    np.testing.assert_allclose(np.asarray(out_v), np.asarray(ref_v),
                               rtol=1e-5, atol=1e-5)

    # prospective MLP (prospective=True) with fused TimeEmbedding
    params_p = init_mlp_params(kp2, in_dim, out_dim, hidden_dim, tdim,
                               prospective=True)
    out_p = jax.block_until_ready(mlp_forward(params_p, x, t, prospective=True))
    ref_p = mlp_reference(params_p, x, t, prospective=True)
    np.testing.assert_allclose(np.asarray(out_p), np.asarray(ref_p),
                               rtol=1e-5, atol=1e-5)

    # larger (ragged) batch: exercises the multi-tile grid + row padding path
    big = 1000
    xb = jax.random.normal(kxb, (big, in_dim), jnp.float32)
    tbv = jax.random.uniform(ktb, (big,), jnp.float32, 0.0, 1.0)
    out_b = jax.block_until_ready(mlp_forward(params_p, xb, tbv, prospective=True))
    ref_b = mlp_reference(params_p, xb, tbv, prospective=True)
    np.testing.assert_allclose(np.asarray(out_b), np.asarray(ref_b),
                               rtol=1e-5, atol=1e-5)

    print("KERNEL_OK")
</pallas_src>

<mosaic_0001>
module attributes {stable_mosaic.version = 11 : i64} {
  func.func @_mlp_kernel_vanilla(%arg0: i32, %arg1: memref<8x1xf32, #tpu.memory_space<vmem>>, %arg2: memref<1x128xf32, #tpu.memory_space<vmem>>, %arg3: memref<1x128xf32, #tpu.memory_space<vmem>>, %arg4: memref<128x2xf32, #tpu.memory_space<vmem>>, %arg5: memref<1x2xf32, #tpu.memory_space<vmem>>, %arg6: memref<8x2xf32, #tpu.memory_space<vmem>>, %arg7: memref<8x128xf32, #tpu.memory_space<vmem>>) attributes {dimension_semantics = [#tpu.dimension_semantics<parallel>], iteration_bounds = array<i64: 1>, scalar_prefetch = 0 : i64, scratch_operands = 1 : i64, tpu.core_type = #tpu.core_type<tc>, window_params = [{transform_indices = @transform_0, window_bounds = array<i64: 8, 1>}, {pipeline_mode = #tpu.pipeline_mode<synchronous>, transform_indices = @transform_1, window_bounds = array<i64: 1, 128>}, {pipeline_mode = #tpu.pipeline_mode<synchronous>, transform_indices = @transform_2, window_bounds = array<i64: 1, 128>}, {pipeline_mode = #tpu.pipeline_mode<synchronous>, transform_indices = @transform_3, window_bounds = array<i64: 128, 2>}, {pipeline_mode = #tpu.pipeline_mode<synchronous>, transform_indices = @transform_4, window_bounds = array<i64: 1, 2>}, {transform_indices = @transform_5, window_bounds = array<i64: 8, 2>}]} {
    %c0 = arith.constant 0 : index
    %c0_0 = arith.constant 0 : index
    %0 = vector.load %arg1[%c0, %c0_0] : memref<8x1xf32, #tpu.memory_space<vmem>>, vector<8x1xf32>
    %c0_1 = arith.constant 0 : index
    %c0_2 = arith.constant 0 : index
    %1 = vector.load %arg2[%c0_1, %c0_2] : memref<1x128xf32, #tpu.memory_space<vmem>>, vector<1x128xf32>
    %2 = vector.broadcast %0 : vector<8x1xf32> to vector<8x128xf32>
    %3 = vector.broadcast %1 : vector<1x128xf32> to vector<8x128xf32>
    %4 = arith.mulf %2, %3 : vector<8x128xf32>
    %c0_3 = arith.constant 0 : index
    %c0_4 = arith.constant 0 : index
    %5 = vector.load %arg3[%c0_3, %c0_4] : memref<1x128xf32, #tpu.memory_space<vmem>>, vector<1x128xf32>
    %6 = vector.broadcast %5 : vector<1x128xf32> to vector<8x128xf32>
    %7 = arith.addf %4, %6 : vector<8x128xf32>
    %cst = arith.constant 0.000000e+00 : f32
    %8 = vector.broadcast %cst : f32 to vector<8x128xf32>
    %9 = arith.maximumf %7, %8 : vector<8x128xf32>
    %c0_5 = arith.constant 0 : index
    %c0_6 = arith.constant 0 : index
    %10 = vector.load %arg7[%c0_5, %c0_6] : memref<8x128xf32, #tpu.memory_space<vmem>>, vector<8x128xf32>
    tpu.vector_store %arg7[%c0_5, %c0_6], %9 {strides = array<i32>} : memref<8x128xf32, #tpu.memory_space<vmem>>, vector<8x128xf32>,
    %c0_7 = arith.constant 0 : index
    %c0_8 = arith.constant 0 : index
    %11 = vector.load %arg7[%c0_7, %c0_8] : memref<8x128xf32, #tpu.memory_space<vmem>>, vector<8x128xf32>
    %c0_9 = arith.constant 0 : index
    %c0_10 = arith.constant 0 : index
    %12 = vector.load %arg4[%c0_9, %c0_10] : memref<128x2xf32, #tpu.memory_space<vmem>>, vector<128x2xf32>
    %cst_11 = arith.constant dense<0.000000e+00> : vector<8x2xf32>
    %13 = tpu.matmul %11, %12, %cst_11 {dimension_numbers = #tpu.dot_dimension_numbers<[1], [0], [0], [1], [0, 0, 1, 1], [], []>} : vector<8x128xf32>, vector<128x2xf32>, vector<8x2xf32> -> vector<8x2xf32>
    %c0_12 = arith.constant 0 : index
    %c0_13 = arith.constant 0 : index
    %14 = vector.load %arg5[%c0_12, %c0_13] : memref<1x2xf32, #tpu.memory_space<vmem>>, vector<1x2xf32>
    %15 = vector.broadcast %14 : vector<1x2xf32> to vector<8x2xf32>
    %16 = arith.addf %13, %15 : vector<8x2xf32>
    %c0_14 = arith.constant 0 : index
    %c0_15 = arith.constant 0 : index
    %17 = vector.load %arg6[%c0_14, %c0_15] : memref<8x2xf32, #tpu.memory_space<vmem>>, vector<8x2xf32>
    tpu.vector_store %arg6[%c0_14, %c0_15], %16 {strides = array<i32>} : memref<8x2xf32, #tpu.memory_space<vmem>>, vector<8x2xf32>,
    return
  }
  func.func @transform_0(%arg0: i32) -> (i32, i32) {
    %c0_i32 = arith.constant 0 : i32
    %c0_i32_0 = arith.constant 0 : i32
    return %arg0, %c0_i32 : i32, i32
  }
  func.func @transform_1(%arg0: i32) -> (i32, i32) {
    %c0_i32 = arith.constant 0 : i32
    %c0_i32_0 = arith.constant 0 : i32
    %c0_i32_1 = arith.constant 0 : i32
    return %c0_i32, %c0_i32_0 : i32, i32
  }
  func.func @transform_2(%arg0: i32) -> (i32, i32) {
    %c0_i32 = arith.constant 0 : i32
    %c0_i32_0 = arith.constant 0 : i32
    %c0_i32_1 = arith.constant 0 : i32
    return %c0_i32, %c0_i32_0 : i32, i32
  }
  func.func @transform_3(%arg0: i32) -> (i32, i32) {
    %c0_i32 = arith.constant 0 : i32
    %c0_i32_0 = arith.constant 0 : i32
    %c0_i32_1 = arith.constant 0 : i32
    return %c0_i32, %c0_i32_0 : i32, i32
  }
  func.func @transform_4(%arg0: i32) -> (i32, i32) {
    %c0_i32 = arith.constant 0 : i32
    %c0_i32_0 = arith.constant 0 : i32
    %c0_i32_1 = arith.constant 0 : i32
    return %c0_i32, %c0_i32_0 : i32, i32
  }
  func.func @transform_5(%arg0: i32) -> (i32, i32) {
    %c0_i32 = arith.constant 0 : i32
    %c0_i32_0 = arith.constant 0 : i32
    return %arg0, %c0_i32 : i32, i32
  }
}

</mosaic_0001>

<llo_original>
// kernel: tpu_custom_call.1
$region0: #{tpu_custom_call.1}
  #allocation0 [shape = 'u32[]', space=smem, size = 0x4, offset = 0x4, fixed_abs, tag = 'smem constant byte address 0x4 - core index']
  #allocation1 [shape = 'u32[144,128]{1,0:T(1,128)}', space=vmem, size = 0x12000, scoped, tag = 'internal scratch']
  #allocation2 [shape = 'f32[8,128]{1,0:T(8,128)}', space=vmem, size = 0x1000, scoped, tag = 'scratch operand']
  %s0 = inlined_call_operand.vmem [shape: f32[8,1], index: 0, kind: input, shape index: {}]
  %s1 = inlined_call_operand.vmem [shape: f32[1,128], index: 1, kind: input, shape index: {}]
  %s2 = inlined_call_operand.vmem [shape: f32[1,128], index: 2, kind: input, shape index: {}]
  %s3 = inlined_call_operand.vmem [shape: f32[128,2], index: 3, kind: input, shape index: {}]
  %s4 = inlined_call_operand.vmem [shape: f32[1,2], index: 4, kind: input, shape index: {}]
  %s5 = inlined_call_operand.vmem [shape: f32[8,2], index: 5, kind: output, shape index: {}]
  %s6 = sld [smem:[#allocation0]]
  $region30: #{tpu_custom_call.1} parent=0
    _
  %s8 = ssub.s32 1, %s6
  %s9 = scalar_select 0, %s8, %s6
  // Predicated region
  $region2: #{tpu_custom_call.1} parent=0 // pred_check
    _
  $region3: #{tpu_custom_call.1} parent=0 // pred_check_branch
    %11 = sbr.rel (0) target = $region5
  $region4: #{tpu_custom_call.1} parent=0 // pred_region
    _
  $region5: #{tpu_custom_call.1} parent=0 // pred_fallthru
    _
  // Predicated region
  $region6: #{tpu_custom_call.1} parent=0 // pred_check
    _
  $region7: #{tpu_custom_call.1} parent=0 // pred_check_branch
    %13 = sbr.rel (0) target = $region9
  $region8: #{tpu_custom_call.1} parent=0 // pred_region
    _
  $region9: #{tpu_custom_call.1} parent=0 // pred_fallthru
    _
  // Predicated region
  $region10: #{tpu_custom_call.1} parent=0 // pred_check
    _
  $region11: #{tpu_custom_call.1} parent=0 // pred_check_branch
    %15 = sbr.rel (0) target = $region13
  $region12: #{tpu_custom_call.1} parent=0 // pred_region
    _
  $region13: #{tpu_custom_call.1} parent=0 // pred_fallthru
    _
  // Predicated region
  $region14: #{tpu_custom_call.1} parent=0 // pred_check
    _
  $region15: #{tpu_custom_call.1} parent=0 // pred_check_branch
    %17 = sbr.rel (0) target = $region17
  $region16: #{tpu_custom_call.1} parent=0 // pred_region
    _
  $region17: #{tpu_custom_call.1} parent=0 // pred_fallthru
    _
  // Predicated region
  $region18: #{tpu_custom_call.1} parent=0 // pred_check
    _
  $region19: #{tpu_custom_call.1} parent=0 // pred_check_branch
    %19 = sbr.rel (0) target = $region21
  $region20: #{tpu_custom_call.1} parent=0 // pred_region
    _
  $region21: #{tpu_custom_call.1} parent=0 // pred_fallthru
    _
  %v20 = vld [vmem:[%s0] sm:$0xff]
  %v21 = vld [vmem:[%s1] sm:$0x1]
  %23 = vset.pattern.permute.xlu0 0
  %24 = vperm.xlu0 %23, %v20
  %v25 = vpop.permute.xlu0 %24
  %v28 = vlaneseq
  %v29 = vshrl.u32 %v28, 7
  %v30 = vsub.s32 0, %v29
  %v31 = vrot.slane %v21, %v30
  %v33 = vmul.f32 %v25, %v31
  %v34 = vld [vmem:[%s2] sm:$0x1]
  %v36 = vlaneseq
  %v37 = vshrl.u32 %v36, 7
  %v38 = vsub.s32 0, %v37
  %v39 = vrot.slane %v34, %v38
  %v41 = vadd.f32 %v33, %v39
  %v42 = vmax.f32 %v41, 0.0
  %43 = vst [vmem:[#allocation2] sm:$0xff] %v42
  %v44 = vld [vmem:[#allocation2] sm:$0xff]
  %v45 = vld [vmem:[%s3] sm:$0xff]
  %v46 = vld [vmem:[%s3 + $0x8] sm:$0xff]
  %v47 = vld [vmem:[%s3 + $0x10] sm:$0xff]
  %v48 = vld [vmem:[%s3 + $0x18] sm:$0xff]
  %v49 = vld [vmem:[%s3 + $0x20] sm:$0xff]
  %v50 = vld [vmem:[%s3 + $0x28] sm:$0xff]
  %v51 = vld [vmem:[%s3 + $0x30] sm:$0xff]
  %v52 = vld [vmem:[%s3 + $0x38] sm:$0xff]
  %v53 = vld [vmem:[%s3 + $0x40] sm:$0xff]
  %v54 = vld [vmem:[%s3 + $0x48] sm:$0xff]
  %v55 = vld [vmem:[%s3 + $0x50] sm:$0xff]
  %v56 = vld [vmem:[%s3 + $0x58] sm:$0xff]
  %v57 = vld [vmem:[%s3 + $0x60] sm:$0xff]
  %v58 = vld [vmem:[%s3 + $0x68] sm:$0xff]
  %v59 = vld [vmem:[%s3 + $0x70] sm:$0xff]
  %v60 = vld [vmem:[%s3 + $0x78] sm:$0xff]
  %v61 = vld [vmem:[%s4] sm:$0x1]
  %v63 = vlaneseq
  %v64 = vshrl.u32 %v63, 7
  %v65 = vsub.s32 0, %v64
  %v66 = vrot.slane %v61, %v65
  %68 = vmatprep.subr.mxu0 0.0
  %69 = vmatpush1.msra.mxu0 %v45
  %70 = vmatprep.subr.mxu0 0.0
  %71 = vmatpush1.msra.mxu0 %v46
  %72 = vmatprep.subr.mxu0 0.0
  %73 = vmatpush1.msra.mxu0 %v47
  %74 = vmatprep.subr.mxu0 0.0
  %75 = vmatpush1.msra.mxu0 %v48
  %76 = vmatprep.subr.mxu0 0.0
  %77 = vmatpush1.msra.mxu0 %v49
  %78 = vmatprep.subr.mxu0 0.0
  %79 = vmatpush1.msra.mxu0 %v50
  %80 = vmatprep.subr.mxu0 0.0
  %81 = vmatpush1.msra.mxu0 %v51
  %82 = vmatprep.subr.mxu0 0.0
  %83 = vmatpush1.msra.mxu0 %v52
  %84 = vmatprep.subr.mxu0 0.0
  %85 = vmatpush1.msra.mxu0 %v53
  %86 = vmatprep.subr.mxu0 0.0
  %87 = vmatpush1.msra.mxu0 %v54
  %88 = vmatprep.subr.mxu0 0.0
  %89 = vmatpush1.msra.mxu0 %v55
  %90 = vmatprep.subr.mxu0 0.0
  %91 = vmatpush1.msra.mxu0 %v56
  %92 = vmatprep.subr.mxu0 0.0
  %93 = vmatpush1.msra.mxu0 %v57
  %94 = vmatprep.subr.mxu0 0.0
  %95 = vmatpush1.msra.mxu0 %v58
  %96 = vmatprep.subr.mxu0 0.0
  %97 = vmatpush1.msra.mxu0 %v59
  %98 = vmatprep.subr.mxu0 0.0
  %99 = vmatpush1.msra.mxu0 %v60
  %100 = vmatprep.subr.mxu0 0.0
  %101 = vmatpush1.msra.mxu0 0.0
  %102 = vmatprep.subr.mxu0 0.0
  %103 = vmatpush1.msra.mxu0 0.0
  %104 = vmatprep.subr.mxu0 0.0
  %105 = vmatpush1.msra.mxu0 0.0
  %106 = vmatprep.subr.mxu0 0.0
  %107 = vmatpush1.msra.mxu0 0.0
  %108 = vmatprep.subr.mxu0 0.0
  %109 = vmatpush1.msra.mxu0 0.0
  %110 = vmatprep.subr.mxu0 0.0
  %111 = vmatpush1.msra.mxu0 0.0
  %112 = vmatprep.subr.mxu0 0.0
  %113 = vmatpush1.msra.mxu0 0.0
  %114 = vmatprep.subr.mxu0 0.0
  %115 = vmatpush1.msra.mxu0 0.0
  %116 = vmatprep.subr.mxu0 0.0
  %117 = vmatpush1.msra.mxu0 0.0
  %118 = vmatprep.subr.mxu0 0.0
  %119 = vmatpush1.msra.mxu0 0.0
  %120 = vmatprep.subr.mxu0 0.0
  %121 = vmatpush1.msra.mxu0 0.0
  %122 = vmatprep.subr.mxu0 0.0
  %123 = vmatpush1.msra.mxu0 0.0
  %124 = vmatprep.subr.mxu0 0.0
  %125 = vmatpush1.msra.mxu0 0.0
  %126 = vmatprep.subr.mxu0 0.0
  %127 = vmatpush1.msra.mxu0 0.0
  %128 = vmatprep.subr.mxu0 0.0
  %129 = vmatpush1.msra.mxu0 0.0
  %130 = vmatprep.subr.mxu0 0.0
  %131 = vmatpush1.msra.mxu0 0.0
  %132 = vmatprep.mubr.f32.mxu0 0.0
  %133 = vmatmul.mubr.f32.gmra.mrb[0].mxu0 %v44
  %v134 = vpop.f32.mrb[0].mxu0
  %v135 = vadd.f32 %v66, %v134
  %v136 = vpop.f32.mrb[0].mxu0
  %137 = vdwg.mxu0
  %vm138 = vcmask 15360
  %139 = vst.msk [vmem:[%s5] sm:$0xff] %vm138, %v135
  // Predicated region
  $region22: #{tpu_custom_call.1} parent=0 // pred_check
    _
  $region23: #{tpu_custom_call.1} parent=0 // pred_check_branch
    %141 = sbr.rel (0) target = $region25
  $region24: #{tpu_custom_call.1} parent=0 // pred_region
    _
  $region25: #{tpu_custom_call.1} parent=0 // pred_fallthru
    _
  // Predicated region
  $region26: #{tpu_custom_call.1} parent=0 // pred_check
    _
  $region27: #{tpu_custom_call.1} parent=0 // pred_check_branch
    %143 = sbr.rel (0) target = $region29
  $region28: #{tpu_custom_call.1} parent=0 // pred_region
    _
  $region29: #{tpu_custom_call.1} parent=0 // pred_fallthru
    _

</llo_original>
